<compile_context>
chip_gen: v7x
topology: tpu7x:2x2x1
jax: 0.10.0
libtpu: 0.0.40
codegen_flags: <defaults>
</compile_context>

<pallas_src>
import math
import functools

import jax
import jax.numpy as jnp
from jax.experimental import pallas as pl
from jax.experimental.pallas import tpu as pltpu


# ---------------------------------------------------------------------------
# Kernel body (shared by the mask / no-mask variants)
# ---------------------------------------------------------------------------
def _sha_body(x_ref, mask_ref, wp_ref, bp_ref, wd_ref, wq_ref, wk_ref, wv_ref,
              woup_ref, o_ref, *, inv_sqrt_h):
    Bt, S, in_dim = x_ref.shape
    tile_n = o_ref.shape[-1]

    x2 = x_ref[...].reshape(Bt * S, in_dim)                     # bf16 (Bt*S, in)

    # Frozen pretrained linear: x @ Wp^T + bp  (bf16 x bf16 -> f32 MXU acc).
    pre = jnp.dot(x2, wp_ref[...], preferred_element_type=jnp.float32)
    pre = pre + bp_ref[...]                                     # (1, tile_n) bcast

    # Adapter down-projection (dropout == identity in eval mode).
    d = jnp.dot(x2, wd_ref[...], preferred_element_type=jnp.float32)   # (Bt*S, r)

    # q / k / v projections (tiny rank-r matmuls).
    q = jnp.dot(d, wq_ref[...], preferred_element_type=jnp.float32).reshape(Bt, S, -1)
    k = jnp.dot(d, wk_ref[...], preferred_element_type=jnp.float32).reshape(Bt, S, -1)
    v = jnp.dot(d, wv_ref[...], preferred_element_type=jnp.float32).reshape(Bt, S, -1)

    # Mini single-head attention: softmax(q k^T / sqrt(h) [+ mask]) v.
    scores = jnp.einsum("bqh,bkh->bqk", q, k,
                        preferred_element_type=jnp.float32) * inv_sqrt_h
    if mask_ref is not None:
        scores = scores + mask_ref[...]          # (1,S,S) or (Bt,S,S) broadcast
    m = jnp.max(scores, axis=-1, keepdims=True)
    e = jnp.exp(scores - m)
    p = e * pl.reciprocal(jnp.sum(e, axis=-1, keepdims=True), approx=True)
    attn = jnp.einsum("bqk,bkh->bqh", p, v,
                      preferred_element_type=jnp.float32)       # (Bt, S, h)

    # Pre-composed (Wo @ Wup) * diag * scaling: one matmul straight to out_dim.
    h = attn.shape[-1]
    up = jnp.dot(attn.reshape(Bt * S, h), woup_ref[...],
                 preferred_element_type=jnp.float32)            # (Bt*S, tile_n)

    o_ref[...] = (pre + up).reshape(Bt, S, tile_n).astype(o_ref.dtype)


def _kernel_nomask(x_ref, wp_ref, bp_ref, wd_ref, wq_ref, wk_ref, wv_ref,
                   woup_ref, o_ref, *, inv_sqrt_h):
    _sha_body(x_ref, None, wp_ref, bp_ref, wd_ref, wq_ref, wk_ref, wv_ref,
              woup_ref, o_ref, inv_sqrt_h=inv_sqrt_h)


def _kernel_mask(x_ref, mask_ref, wp_ref, bp_ref, wd_ref, wq_ref, wk_ref,
                 wv_ref, woup_ref, o_ref, *, inv_sqrt_h):
    _sha_body(x_ref, mask_ref, wp_ref, bp_ref, wd_ref, wq_ref, wk_ref, wv_ref,
              woup_ref, o_ref, inv_sqrt_h=inv_sqrt_h)


# ---------------------------------------------------------------------------
# Tile selection helpers
# ---------------------------------------------------------------------------
def _pick_block_b(B, S, target_rows=1024):
    """Batch elements per grid step (amortize step overhead, keep VMEM bounded)."""
    bt = min(B, max(1, target_rows // max(S, 1)))
    while B % bt:
        bt -= 1
    return bt


def _pick_tile_n(out_dim, target=512):
    """out_dim tile: full dim if small, else a 128-multiple divisor <= target."""
    if out_dim <= target:
        return out_dim
    for t in range(target, 0, -128):
        if t % 128 == 0 and out_dim % t == 0:
            return t
    return out_dim


# ---------------------------------------------------------------------------
# Wrapper
# ---------------------------------------------------------------------------
def sha_diagonal_forward(x, kp, attention_mask=None, *, block_b=None,
                         tile_n=None):
    """x: (B, S, in_dim) float32.  kp: prepared kernel params (see below).
    attention_mask: None, (S,S), (1,S,S), (B,S,S) or HF-style (B|1,1,S|1,S)."""
    B, S, in_dim = x.shape
    out_dim = kp["wp_t"].shape[1]
    h = kp["wq_t"].shape[1]
    inv_sqrt_h = 1.0 / math.sqrt(h)

    if block_b is None:
        block_b = _pick_block_b(B, S)
    if tile_n is None:
        tile_n = _pick_tile_n(out_dim)
    nb = B // block_b
    nn = out_dim // tile_n

    x_bf16 = x.astype(jnp.bfloat16)

    in_specs = [pl.BlockSpec((block_b, S, in_dim), lambda bi, ni: (bi, 0, 0))]
    inputs = [x_bf16]

    if attention_mask is not None:
        mask = jnp.asarray(attention_mask, jnp.float32)
        if mask.ndim == 4:                       # (B|1, 1, S|1, S) HF-style
            mask = mask[:, 0]
        if mask.ndim == 2:                       # (S, S)
            mask = mask[None]
        mask = jnp.broadcast_to(mask, (mask.shape[0], S, S))
        if mask.shape[0] == 1:
            # One shared (1, S, S) block re-used by every grid step.
            in_specs.append(pl.BlockSpec((1, S, S), lambda bi, ni: (0, 0, 0)))
        else:
            mask = jnp.broadcast_to(mask, (B, S, S))
            in_specs.append(
                pl.BlockSpec((block_b, S, S), lambda bi, ni: (bi, 0, 0)))
        inputs.append(mask)
        kernel = functools.partial(_kernel_mask, inv_sqrt_h=inv_sqrt_h)
    else:
        kernel = functools.partial(_kernel_nomask, inv_sqrt_h=inv_sqrt_h)

    r = kp["wd_t"].shape[1]
    in_specs += [
        pl.BlockSpec((in_dim, tile_n), lambda bi, ni: (0, ni)),   # Wp^T (bf16)
        pl.BlockSpec((1, tile_n), lambda bi, ni: (0, ni)),        # bp
        pl.BlockSpec((in_dim, r), lambda bi, ni: (0, 0)),         # Wd^T (bf16)
        pl.BlockSpec((r, h), lambda bi, ni: (0, 0)),              # Wq^T
        pl.BlockSpec((r, h), lambda bi, ni: (0, 0)),              # Wk^T
        pl.BlockSpec((r, h), lambda bi, ni: (0, 0)),              # Wv^T
        pl.BlockSpec((h, tile_n), lambda bi, ni: (0, ni)),        # Wo@Wup*diag*scl
    ]
    inputs += [kp["wp_t"], kp["bp"], kp["wd_t"], kp["wq_t"], kp["wk_t"],
               kp["wv_t"], kp["woup_t"]]

    return pl.pallas_call(
        kernel,
        out_shape=jax.ShapeDtypeStruct((B, S, out_dim), jnp.float32),
        grid_spec=pltpu.PrefetchScalarGridSpec(
            num_scalar_prefetch=0,
            grid=(nb, nn),
            in_specs=in_specs,
            out_specs=pl.BlockSpec((block_b, S, tile_n),
                                   lambda bi, ni: (bi, 0, ni)),
        ),
        compiler_params=pltpu.CompilerParams(
            dimension_semantics=("parallel", "parallel")),
    )(*inputs)


# ---------------------------------------------------------------------------
# Parameter construction (raw PyTorch-layout weights + kernel-ready prep)
# ---------------------------------------------------------------------------
def init_raw_params(key, in_dim, out_dim, r=8, c=2):
    """Deterministic synthetic params with PyTorch nn.Linear (out, in) layout."""
    h = r // c
    ks = jax.random.split(key, 6)
    s = lambda fan_in: 1.0 / math.sqrt(fan_in)
    wp = jax.random.uniform(ks[0], (out_dim, in_dim), jnp.float32, -s(in_dim), s(in_dim))
    bp = jax.random.uniform(ks[1], (out_dim,), jnp.float32, -s(in_dim), s(in_dim))
    wd = jax.random.uniform(ks[2], (r, in_dim), jnp.float32, -s(in_dim), s(in_dim))
    wqkv = jax.random.uniform(ks[3], (3 * h, r), jnp.float32, -s(r), s(r))
    wo = jax.random.uniform(ks[4], (r, h), jnp.float32, -s(h), s(h))
    wup = jax.random.uniform(ks[5], (out_dim, r), jnp.float32, -s(r), s(r))
    diag_b = jnp.full((out_dim,), 0.001, jnp.float32)   # nn.init.constant_(..., 0.001)
    return dict(wp=wp, bp=bp, wd=wd, wqkv=wqkv, wo=wo, wup=wup, diag_b=diag_b)


def prepare_kernel_params(raw, *, r=8, c=2, alpha=32.0):
    """Pre-transpose / fuse / cast weights once, outside the kernel."""
    h = r // c
    scaling = alpha / r
    # (h, out_dim): Wo^T @ Wup^T with diag * scaling folded into the columns.
    woup = (raw["wo"].T @ raw["wup"].T) * (raw["diag_b"] * scaling)[None, :]
    wqkv_t = raw["wqkv"].T                       # (r, 3h) columns = q | k | v
    return dict(
        wp_t=raw["wp"].T.astype(jnp.bfloat16),        # (in, out)
        bp=raw["bp"].reshape(1, -1).astype(jnp.float32),
        wd_t=raw["wd"].T.astype(jnp.bfloat16),        # (in, r)
        wq_t=wqkv_t[:, 0:h].astype(jnp.float32),      # (r, h)
        wk_t=wqkv_t[:, h:2 * h].astype(jnp.float32),  # (r, h)
        wv_t=wqkv_t[:, 2 * h:3 * h].astype(jnp.float32),
        woup_t=woup.astype(jnp.float32),              # (h, out)
    )


# ---------------------------------------------------------------------------
# Pure-JAX f32 reference replicating the PyTorch forward (eval mode)
# ---------------------------------------------------------------------------
def _reference(x, raw, attention_mask=None, *, r=8, c=2, alpha=32.0):
    h = r // c
    pre = x @ raw["wp"].T + raw["bp"]
    d = x @ raw["wd"].T
    qkv = d @ raw["wqkv"].T
    q, k, v = qkv[..., :h], qkv[..., h:2 * h], qkv[..., 2 * h:]
    sc = jnp.einsum("bqh,bkh->bqk", q, k) / math.sqrt(h)
    if attention_mask is not None:
        sc = sc + jnp.asarray(attention_mask, jnp.float32)
    p = jax.nn.softmax(sc, axis=-1)
    a = jnp.einsum("bqk,bkh->bqh", p, v)
    up = (a @ raw["wo"].T) @ raw["wup"].T
    return pre + up * raw["diag_b"] * (alpha / r)


if __name__ == "__main__":
    B, S, in_dim, out_dim, r, c, alpha = 2, 8, 32, 32, 8, 2, 32.0

    key = jax.random.PRNGKey(0)
    kx, kw = jax.random.split(key)
    x = jax.random.normal(kx, (B, S, in_dim), jnp.float32)

    raw = init_raw_params(kw, in_dim, out_dim, r=r, c=c)
    kparams = prepare_kernel_params(raw, r=r, c=c, alpha=alpha)

    # --- no-mask path (no zero mask materialized) ---
    out = sha_diagonal_forward(x, kparams, attention_mask=None)
    out = jax.block_until_ready(out)
    ref = _reference(x, raw, None, r=r, c=c, alpha=alpha)
    assert out.shape == (B, S, out_dim)
    assert jnp.allclose(out, ref, atol=2e-2, rtol=2e-2), "mismatch (no mask)"

    # --- shared causal mask path ---
    causal = jnp.where(jnp.tril(jnp.ones((S, S), bool)), 0.0, -1e9)[None]  # (1,S,S)
    out_m = sha_diagonal_forward(x, kparams, attention_mask=causal)
    out_m = jax.block_until_ready(out_m)
    ref_m = _reference(x, raw, causal, r=r, c=c, alpha=alpha)
    assert jnp.allclose(out_m, ref_m, atol=2e-2, rtol=2e-2), "mismatch (mask)"

    print("KERNEL_OK")
</pallas_src>

<mosaic_0001>
module attributes {stable_mosaic.version = 11 : i64} {
  func.func @_kernel_nomask(%arg0: i32, %arg1: i32, %arg2: memref<2x8x32xbf16, #tpu.memory_space<vmem>>, %arg3: memref<32x32xbf16, #tpu.memory_space<vmem>>, %arg4: memref<1x32xf32, #tpu.memory_space<vmem>>, %arg5: memref<32x8xbf16, #tpu.memory_space<vmem>>, %arg6: memref<8x4xf32, #tpu.memory_space<vmem>>, %arg7: memref<8x4xf32, #tpu.memory_space<vmem>>, %arg8: memref<8x4xf32, #tpu.memory_space<vmem>>, %arg9: memref<4x32xf32, #tpu.memory_space<vmem>>, %arg10: memref<2x8x32xf32, #tpu.memory_space<vmem>>) attributes {dimension_semantics = [#tpu.dimension_semantics<parallel>, #tpu.dimension_semantics<parallel>], iteration_bounds = array<i64: 1, 1>, scalar_prefetch = 0 : i64, scratch_operands = 0 : i64, tpu.core_type = #tpu.core_type<tc>, window_params = [{transform_indices = @transform_0, window_bounds = array<i64: 2, 8, 32>}, {transform_indices = @transform_1, window_bounds = array<i64: 32, 32>}, {transform_indices = @transform_2, window_bounds = array<i64: 1, 32>}, {pipeline_mode = #tpu.pipeline_mode<synchronous>, transform_indices = @transform_3, window_bounds = array<i64: 32, 8>}, {pipeline_mode = #tpu.pipeline_mode<synchronous>, transform_indices = @transform_4, window_bounds = array<i64: 8, 4>}, {pipeline_mode = #tpu.pipeline_mode<synchronous>, transform_indices = @transform_5, window_bounds = array<i64: 8, 4>}, {pipeline_mode = #tpu.pipeline_mode<synchronous>, transform_indices = @transform_6, window_bounds = array<i64: 8, 4>}, {transform_indices = @transform_7, window_bounds = array<i64: 4, 32>}, {transform_indices = @transform_8, window_bounds = array<i64: 2, 8, 32>}]} {
    %c0 = arith.constant 0 : index
    %c0_0 = arith.constant 0 : index
    %c0_1 = arith.constant 0 : index
    %0 = vector.load %arg2[%c0, %c0_0, %c0_1] : memref<2x8x32xbf16, #tpu.memory_space<vmem>>, vector<2x8x32xbf16>
    %1 = vector.shape_cast %0 : vector<2x8x32xbf16> to vector<16x32xbf16>
    %c0_2 = arith.constant 0 : index
    %c0_3 = arith.constant 0 : index
    %2 = vector.load %arg3[%c0_2, %c0_3] : memref<32x32xbf16, #tpu.memory_space<vmem>>, vector<32x32xbf16>
    %cst = arith.constant dense<0.000000e+00> : vector<16x32xf32>
    %3 = tpu.matmul %1, %2, %cst {dimension_numbers = #tpu.dot_dimension_numbers<[1], [0], [0], [1], [0, 0, 1, 1], [], []>} : vector<16x32xbf16>, vector<32x32xbf16>, vector<16x32xf32> -> vector<16x32xf32>
    %c0_4 = arith.constant 0 : index
    %c0_5 = arith.constant 0 : index
    %4 = vector.load %arg4[%c0_4, %c0_5] : memref<1x32xf32, #tpu.memory_space<vmem>>, vector<1x32xf32>
    %5 = vector.broadcast %4 : vector<1x32xf32> to vector<16x32xf32>
    %6 = arith.addf %3, %5 : vector<16x32xf32>
    %c0_6 = arith.constant 0 : index
    %c0_7 = arith.constant 0 : index
    %7 = vector.load %arg5[%c0_6, %c0_7] : memref<32x8xbf16, #tpu.memory_space<vmem>>, vector<32x8xbf16>
    %cst_8 = arith.constant dense<0.000000e+00> : vector<16x8xf32>
    %8 = tpu.matmul %1, %7, %cst_8 {dimension_numbers = #tpu.dot_dimension_numbers<[1], [0], [0], [1], [0, 0, 1, 1], [], []>} : vector<16x32xbf16>, vector<32x8xbf16>, vector<16x8xf32> -> vector<16x8xf32>
    %c0_9 = arith.constant 0 : index
    %c0_10 = arith.constant 0 : index
    %9 = vector.load %arg6[%c0_9, %c0_10] : memref<8x4xf32, #tpu.memory_space<vmem>>, vector<8x4xf32>
    %cst_11 = arith.constant dense<0.000000e+00> : vector<16x4xf32>
    %10 = tpu.matmul %8, %9, %cst_11 {dimension_numbers = #tpu.dot_dimension_numbers<[1], [0], [0], [1], [0, 0, 1, 1], [], []>} : vector<16x8xf32>, vector<8x4xf32>, vector<16x4xf32> -> vector<16x4xf32>
    %11 = vector.shape_cast %10 : vector<16x4xf32> to vector<2x8x4xf32>
    %c0_12 = arith.constant 0 : index
    %c0_13 = arith.constant 0 : index
    %12 = vector.load %arg7[%c0_12, %c0_13] : memref<8x4xf32, #tpu.memory_space<vmem>>, vector<8x4xf32>
    %cst_14 = arith.constant dense<0.000000e+00> : vector<16x4xf32>
    %13 = tpu.matmul %8, %12, %cst_14 {dimension_numbers = #tpu.dot_dimension_numbers<[1], [0], [0], [1], [0, 0, 1, 1], [], []>} : vector<16x8xf32>, vector<8x4xf32>, vector<16x4xf32> -> vector<16x4xf32>
    %14 = vector.shape_cast %13 : vector<16x4xf32> to vector<2x8x4xf32>
    %c0_15 = arith.constant 0 : index
    %c0_16 = arith.constant 0 : index
    %15 = vector.load %arg8[%c0_15, %c0_16] : memref<8x4xf32, #tpu.memory_space<vmem>>, vector<8x4xf32>
    %cst_17 = arith.constant dense<0.000000e+00> : vector<16x4xf32>
    %16 = tpu.matmul %8, %15, %cst_17 {dimension_numbers = #tpu.dot_dimension_numbers<[1], [0], [0], [1], [0, 0, 1, 1], [], []>} : vector<16x8xf32>, vector<8x4xf32>, vector<16x4xf32> -> vector<16x4xf32>
    %17 = vector.shape_cast %16 : vector<16x4xf32> to vector<2x8x4xf32>
    "tpu.trace_start"() <{level = 10 : i32, message = "bqh,bkh->bqk"}> : () -> ()
    %cst_18 = arith.constant dense<0.000000e+00> : vector<2x8x8xf32>
    %18 = tpu.matmul %11, %14, %cst_18 {dimension_numbers = #tpu.dot_dimension_numbers<[2], [2], [1], [1], [0, 0, 0, 1, 1, 1], [0], [0]>} : vector<2x8x4xf32>, vector<2x8x4xf32>, vector<2x8x8xf32> -> vector<2x8x8xf32>
    "tpu.trace_stop"() : () -> ()
    %cst_19 = arith.constant 5.000000e-01 : f32
    %19 = vector.broadcast %cst_19 : f32 to vector<2x8x8xf32>
    %20 = arith.mulf %18, %19 : vector<2x8x8xf32>
    %cst_20 = arith.constant dense<0xFF800000> : vector<2x8xf32>
    %21 = vector.multi_reduction <maximumf>, %20, %cst_20 [2] : vector<2x8x8xf32> to vector<2x8xf32>
    %22 = vector.shape_cast %21 : vector<2x8xf32> to vector<2x8x1xf32>
    %23 = vector.broadcast %22 : vector<2x8x1xf32> to vector<2x8x8xf32>
    %24 = arith.subf %20, %23 : vector<2x8x8xf32>
    %25 = math.exp %24 : vector<2x8x8xf32>
    %cst_21 = arith.constant dense<0.000000e+00> : vector<2x8xf32>
    %26 = vector.multi_reduction <add>, %25, %cst_21 [2] : vector<2x8x8xf32> to vector<2x8xf32>
    %27 = vector.shape_cast %26 : vector<2x8xf32> to vector<2x8x1xf32>
    %28 = tpu.reciprocal %27 {approx = true} : vector<2x8x1xf32> -> vector<2x8x1xf32>
    %29 = vector.broadcast %28 : vector<2x8x1xf32> to vector<2x8x8xf32>
    %30 = arith.mulf %25, %29 : vector<2x8x8xf32>
    "tpu.trace_start"() <{level = 10 : i32, message = "bqk,bkh->bqh"}> : () -> ()
    %cst_22 = arith.constant dense<0.000000e+00> : vector<2x8x4xf32>
    %31 = tpu.matmul %30, %17, %cst_22 {dimension_numbers = #tpu.dot_dimension_numbers<[2], [1], [1], [2], [0, 0, 0, 1, 1, 2], [0], [0]>} : vector<2x8x8xf32>, vector<2x8x4xf32>, vector<2x8x4xf32> -> vector<2x8x4xf32>
    "tpu.trace_stop"() : () -> ()
    %32 = vector.shape_cast %31 : vector<2x8x4xf32> to vector<16x4xf32>
    %c0_23 = arith.constant 0 : index
    %c0_24 = arith.constant 0 : index
    %33 = vector.load %arg9[%c0_23, %c0_24] : memref<4x32xf32, #tpu.memory_space<vmem>>, vector<4x32xf32>
    %cst_25 = arith.constant dense<0.000000e+00> : vector<16x32xf32>
    %34 = tpu.matmul %32, %33, %cst_25 {dimension_numbers = #tpu.dot_dimension_numbers<[1], [0], [0], [1], [0, 0, 1, 1], [], []>} : vector<16x4xf32>, vector<4x32xf32>, vector<16x32xf32> -> vector<16x32xf32>
    %35 = arith.addf %6, %34 : vector<16x32xf32>
    %36 = vector.shape_cast %35 : vector<16x32xf32> to vector<2x8x32xf32>
    %c0_26 = arith.constant 0 : index
    %c0_27 = arith.constant 0 : index
    %c0_28 = arith.constant 0 : index
    %37 = vector.load %arg10[%c0_26, %c0_27, %c0_28] : memref<2x8x32xf32, #tpu.memory_space<vmem>>, vector<2x8x32xf32>
    tpu.vector_store %arg10[%c0_26, %c0_27, %c0_28], %36 {strides = array<i32>} : memref<2x8x32xf32, #tpu.memory_space<vmem>>, vector<2x8x32xf32>,
    return
  }
  func.func @transform_0(%arg0: i32, %arg1: i32) -> (i32, i32, i32) {
    %c0_i32 = arith.constant 0 : i32
    %c0_i32_0 = arith.constant 0 : i32
    %c0_i32_1 = arith.constant 0 : i32
    return %arg0, %c0_i32, %c0_i32_0 : i32, i32, i32
  }
  func.func @transform_1(%arg0: i32, %arg1: i32) -> (i32, i32) {
    %c0_i32 = arith.constant 0 : i32
    %c0_i32_0 = arith.constant 0 : i32
    return %c0_i32, %arg1 : i32, i32
  }
  func.func @transform_2(%arg0: i32, %arg1: i32) -> (i32, i32) {
    %c0_i32 = arith.constant 0 : i32
    %c0_i32_0 = arith.constant 0 : i32
    return %c0_i32, %arg1 : i32, i32
  }
  func.func @transform_3(%arg0: i32, %arg1: i32) -> (i32, i32) {
    %c0_i32 = arith.constant 0 : i32
    %c0_i32_0 = arith.constant 0 : i32
    %c0_i32_1 = arith.constant 0 : i32
    return %c0_i32, %c0_i32_0 : i32, i32
  }
  func.func @transform_4(%arg0: i32, %arg1: i32) -> (i32, i32) {
    %c0_i32 = arith.constant 0 : i32
    %c0_i32_0 = arith.constant 0 : i32
    %c0_i32_1 = arith.constant 0 : i32
    return %c0_i32, %c0_i32_0 : i32, i32
  }
  func.func @transform_5(%arg0: i32, %arg1: i32) -> (i32, i32) {
    %c0_i32 = arith.constant 0 : i32
    %c0_i32_0 = arith.constant 0 : i32
    %c0_i32_1 = arith.constant 0 : i32
    return %c0_i32, %c0_i32_0 : i32, i32
  }
  func.func @transform_6(%arg0: i32, %arg1: i32) -> (i32, i32) {
    %c0_i32 = arith.constant 0 : i32
    %c0_i32_0 = arith.constant 0 : i32
    %c0_i32_1 = arith.constant 0 : i32
    return %c0_i32, %c0_i32_0 : i32, i32
  }
  func.func @transform_7(%arg0: i32, %arg1: i32) -> (i32, i32) {
    %c0_i32 = arith.constant 0 : i32
    %c0_i32_0 = arith.constant 0 : i32
    return %c0_i32, %arg1 : i32, i32
  }
  func.func @transform_8(%arg0: i32, %arg1: i32) -> (i32, i32, i32) {
    %c0_i32 = arith.constant 0 : i32
    %c0_i32_0 = arith.constant 0 : i32
    return %arg0, %c0_i32, %arg1 : i32, i32, i32
  }
}

</mosaic_0001>

<llo_original>
// kernel: tpu_custom_call.1
$region0: #{tpu_custom_call.1}
  #allocation0 [shape = 'u32[]', space=smem, size = 0x4, offset = 0x4, fixed_abs, tag = 'smem constant byte address 0x4 - core index']
  #allocation1 [shape = 'u32[144,128]{1,0:T(1,128)}', space=vmem, size = 0x12000, scoped, tag = 'internal scratch']
  %s0 = inlined_call_operand.vmem [shape: bf16[2,8,32], index: 0, kind: input, shape index: {}]
  %s1 = inlined_call_operand.vmem [shape: bf16[32,32], index: 1, kind: input, shape index: {}]
  %s2 = inlined_call_operand.vmem [shape: f32[1,32], index: 2, kind: input, shape index: {}]
  %s3 = inlined_call_operand.vmem [shape: bf16[32,8], index: 3, kind: input, shape index: {}]
  %s4 = inlined_call_operand.vmem [shape: f32[8,4], index: 4, kind: input, shape index: {}]
  %s5 = inlined_call_operand.vmem [shape: f32[8,4], index: 5, kind: input, shape index: {}]
  %s6 = inlined_call_operand.vmem [shape: f32[8,4], index: 6, kind: input, shape index: {}]
  %s7 = inlined_call_operand.vmem [shape: f32[4,32], index: 7, kind: input, shape index: {}]
  %s8 = inlined_call_operand.hbm [shape: f32[2,8,32], index: 8, kind: output, shape index: {}]
  %s9 = sld [smem:[#allocation0]]
  $region42: #{tpu_custom_call.1} parent=0
    _
  %s11 = ssub.s32 1, %s9
  %s12 = scalar_select 0, %s11, %s9
  $region1: #{tpu_custom_call.1} parent=0
    #allocation2 [shape = 'u8[8192]{0}', space=vmem, size = 0x2000, scoped, tag = 'output window, operand 0, single buffered']
    #allocation3 [shape = 's32[1]{0}', space=sflag, size = 0x4, scoped, tag = 'scoped memory for tpu_custom_call.1']
    %13 = vsyncpa [#allocation3], 0
    // Predicated region
    $region2: #{tpu_custom_call.1} parent=1 // pred_check
      _
    $region3: #{tpu_custom_call.1} parent=1 // pred_check_branch
      %15 = sbr.rel (0) target = $region5
    $region4: #{tpu_custom_call.1} parent=1 // pred_region
      _
    $region5: #{tpu_custom_call.1} parent=1 // pred_fallthru
      _
    // Predicated region
    $region6: #{tpu_custom_call.1} parent=1 // pred_check
      _
    $region7: #{tpu_custom_call.1} parent=1 // pred_check_branch
      %17 = sbr.rel (0) target = $region9
    $region8: #{tpu_custom_call.1} parent=1 // pred_region
      _
    $region9: #{tpu_custom_call.1} parent=1 // pred_fallthru
      _
    // Predicated region
    $region10: #{tpu_custom_call.1} parent=1 // pred_check
      _
    $region11: #{tpu_custom_call.1} parent=1 // pred_check_branch
      %19 = sbr.rel (0) target = $region13
    $region12: #{tpu_custom_call.1} parent=1 // pred_region
      _
    $region13: #{tpu_custom_call.1} parent=1 // pred_fallthru
      _
    // Predicated region
    $region14: #{tpu_custom_call.1} parent=1 // pred_check
      _
    $region15: #{tpu_custom_call.1} parent=1 // pred_check_branch
      %21 = sbr.rel (0) target = $region17
    $region16: #{tpu_custom_call.1} parent=1 // pred_region
      _
    $region17: #{tpu_custom_call.1} parent=1 // pred_fallthru
      _
    // Predicated region
    $region18: #{tpu_custom_call.1} parent=1 // pred_check
      _
    $region19: #{tpu_custom_call.1} parent=1 // pred_check_branch
      %23 = sbr.rel (0) target = $region21
    $region20: #{tpu_custom_call.1} parent=1 // pred_region
      _
    $region21: #{tpu_custom_call.1} parent=1 // pred_fallthru
      _
    // Predicated region
    $region22: #{tpu_custom_call.1} parent=1 // pred_check
      _
    $region23: #{tpu_custom_call.1} parent=1 // pred_check_branch
      %25 = sbr.rel (0) target = $region25
    $region24: #{tpu_custom_call.1} parent=1 // pred_region
      _
    $region25: #{tpu_custom_call.1} parent=1 // pred_fallthru
      _
    // Predicated region
    $region26: #{tpu_custom_call.1} parent=1 // pred_check
      _
    $region27: #{tpu_custom_call.1} parent=1 // pred_check_branch
      %27 = sbr.rel (0) target = $region29
    $region28: #{tpu_custom_call.1} parent=1 // pred_region
      _
    $region29: #{tpu_custom_call.1} parent=1 // pred_fallthru
      _
    // Predicated region
    $region30: #{tpu_custom_call.1} parent=1 // pred_check
      _
    $region31: #{tpu_custom_call.1} parent=1 // pred_check_branch
      %29 = sbr.rel (0) target = $region33
    $region32: #{tpu_custom_call.1} parent=1 // pred_region
      _
    $region33: #{tpu_custom_call.1} parent=1 // pred_fallthru
      _
    %v31 = vld [vmem:[%s0] sm:$0xf]
    %v32 = vld [vmem:[%s0 + $0x4] sm:$0xf]
    %v33 = vld [vmem:[%s1] sm:$0xf]
    %v34 = vld [vmem:[%s1 + $0x4] sm:$0xf]
    %v35 = vld [vmem:[%s1 + $0x8] sm:$0xf]
    %v36 = vld [vmem:[%s1 + $0xc] sm:$0xf]
    %v37 = vld [vmem:[%s2] sm:$0x1]
    %v39 = vlaneseq
    %v40 = vshrl.u32 %v39, 7
    %v41 = vsub.s32 0, %v40
    %v42 = vrot.slane %v37, %v41
    %v46 = vunpack.c.l.b16 %v31
    %v47 = vunpack.c.l.b16 %v32
    %v48 = vpack.c.b16 %v47, %v46
    %v53 = vunpack.c.l.b16 %v33
    %v54 = vunpack.c.l.b16 %v34
    %v55 = vunpack.c.l.b16 %v35
    %v56 = vunpack.c.l.b16 %v36
    %v57 = vpack.c.b16 %v54, %v53
    %v58 = vpack.c.b16 %v56, %v55
    %vm61 = vcmask 261120
    %v63 = vsel %vm61, %v48, 0
    %65 = vmatprep.subr.bf16.mxu0 0
    %66 = vmatpush1.bf16.msra.mxu0 %v57
    %67 = vmatprep.subr.bf16.mxu0 0
    %68 = vmatpush1.bf16.msra.mxu0 %v58
    %69 = vmatprep.subr.bf16.mxu0 0
    %70 = vmatpush1.bf16.msra.mxu0 0
    %71 = vmatprep.subr.bf16.mxu0 0
    %72 = vmatpush1.bf16.msra.mxu0 0
    %73 = vmatprep.subr.bf16.mxu0 0
    %74 = vmatpush1.bf16.msra.mxu0 0
    %75 = vmatprep.subr.bf16.mxu0 0
    %76 = vmatpush1.bf16.msra.mxu0 0
    %77 = vmatprep.subr.bf16.mxu0 0
    %78 = vmatpush1.bf16.msra.mxu0 0
    %79 = vmatprep.subr.bf16.mxu0 0
    %80 = vmatpush1.bf16.msra.mxu0 0
    %81 = vmatprep.subr.bf16.mxu0 0
    %82 = vmatpush1.bf16.msra.mxu0 0
    %83 = vmatprep.subr.bf16.mxu0 0
    %84 = vmatpush1.bf16.msra.mxu0 0
    %85 = vmatprep.subr.bf16.mxu0 0
    %86 = vmatpush1.bf16.msra.mxu0 0
    %87 = vmatprep.subr.bf16.mxu0 0
    %88 = vmatpush1.bf16.msra.mxu0 0
    %89 = vmatprep.subr.bf16.mxu0 0
    %90 = vmatpush1.bf16.msra.mxu0 0
    %91 = vmatprep.subr.bf16.mxu0 0
    %92 = vmatpush1.bf16.msra.mxu0 0
    %93 = vmatprep.subr.bf16.mxu0 0
    %94 = vmatpush1.bf16.msra.mxu0 0
    %95 = vmatprep.subr.bf16.mxu0 0
    %96 = vmatpush1.bf16.msra.mxu0 0
    %97 = vmatprep.mubr.bf16.mxu0 0
    %98 = vmatmul.mubr.bf16.gmra.mrb[0].mxu0 %v63
    %v99 = vpop.f32.mrb[0].mxu0
    %v100 = vadd.f32 %v42, %v99
    %v101 = vpop.f32.mrb[0].mxu0
    %v102 = vpop.f32.mrb[0].mxu0
    %v103 = vadd.f32 %v42, %v102
    %v104 = vpop.f32.mrb[0].mxu0
    %105 = vdwg.mxu0
    %v106 = vld [vmem:[%s3] sm:$0xf]
    %v107 = vld [vmem:[%s3 + $0x4] sm:$0xf]
    %v108 = vld [vmem:[%s3 + $0x8] sm:$0xf]
    %v109 = vld [vmem:[%s3 + $0xc] sm:$0xf]
    %v114 = vunpack.c.l.b16 %v106
    %v115 = vunpack.c.l.b16 %v107
    %v116 = vunpack.c.l.b16 %v108
    %v117 = vunpack.c.l.b16 %v109
    %v118 = vpack.c.b16 %v115, %v114
    %v119 = vpack.c.b16 %v117, %v116
    %122 = vmatprep.subr.bf16.mxu0 0
    %123 = vmatpush1.bf16.msra.mxu0 %v118
    %124 = vmatprep.subr.bf16.mxu0 0
    %125 = vmatpush1.bf16.msra.mxu0 %v119
    %126 = vmatprep.subr.bf16.mxu0 0
    %127 = vmatpush1.bf16.msra.mxu0 0
    %128 = vmatprep.subr.bf16.mxu0 0
    %129 = vmatpush1.bf16.msra.mxu0 0
    %130 = vmatprep.subr.bf16.mxu0 0
    %131 = vmatpush1.bf16.msra.mxu0 0
    %132 = vmatprep.subr.bf16.mxu0 0
    %133 = vmatpush1.bf16.msra.mxu0 0
    %134 = vmatprep.subr.bf16.mxu0 0
    %135 = vmatpush1.bf16.msra.mxu0 0
    %136 = vmatprep.subr.bf16.mxu0 0
    %137 = vmatpush1.bf16.msra.mxu0 0
    %138 = vmatprep.subr.bf16.mxu0 0
    %139 = vmatpush1.bf16.msra.mxu0 0
    %140 = vmatprep.subr.bf16.mxu0 0
    %141 = vmatpush1.bf16.msra.mxu0 0
    %142 = vmatprep.subr.bf16.mxu0 0
    %143 = vmatpush1.bf16.msra.mxu0 0
    %144 = vmatprep.subr.bf16.mxu0 0
    %145 = vmatpush1.bf16.msra.mxu0 0
    %146 = vmatprep.subr.bf16.mxu0 0
    %147 = vmatpush1.bf16.msra.mxu0 0
    %148 = vmatprep.subr.bf16.mxu0 0
    %149 = vmatpush1.bf16.msra.mxu0 0
    %150 = vmatprep.subr.bf16.mxu0 0
    %151 = vmatpush1.bf16.msra.mxu0 0
    %152 = vmatprep.subr.bf16.mxu0 0
    %153 = vmatpush1.bf16.msra.mxu0 0
    %154 = vmatprep.mubr.bf16.mxu0 0
    %155 = vmatmul.mubr.bf16.gmra.mrb[0].mxu0 %v63
    %v156 = vpop.f32.mrb[0].mxu0
    %v157 = vadd.f32 0.0, %v156
    %v158 = vpop.f32.mrb[0].mxu0
    %v159 = vpop.f32.mrb[0].mxu0
    %v160 = vadd.f32 0.0, %v159
    %v161 = vpop.f32.mrb[0].mxu0
    %162 = vdwg.mxu0
    %v163 = vld [vmem:[%s4] sm:$0xff]
    %vm164 = vcmask 64512
    %v166 = vsel %vm164, %v157, 0
    %v169 = vsel %vm164, %v160, 0
    %171 = vmatprep.subr.mxu0 0.0
    %172 = vmatpush1.msra.mxu0 %v163
    %173 = vmatprep.subr.mxu0 0.0
    %174 = vmatpush1.msra.mxu0 0.0
    %175 = vmatprep.subr.mxu0 0.0
    %176 = vmatpush1.msra.mxu0 0.0
    %177 = vmatprep.subr.mxu0 0.0
    %178 = vmatpush1.msra.mxu0 0.0
    %179 = vmatprep.subr.mxu0 0.0
    %180 = vmatpush1.msra.mxu0 0.0
    %181 = vmatprep.subr.mxu0 0.0
    %182 = vmatpush1.msra.mxu0 0.0
    %183 = vmatprep.subr.mxu0 0.0
    %184 = vmatpush1.msra.mxu0 0.0
    %185 = vmatprep.subr.mxu0 0.0
    %186 = vmatpush1.msra.mxu0 0.0
    %187 = vmatprep.subr.mxu0 0.0
    %188 = vmatpush1.msra.mxu0 0.0
    %189 = vmatprep.subr.mxu0 0.0
    %190 = vmatpush1.msra.mxu0 0.0
    %191 = vmatprep.subr.mxu0 0.0
    %192 = vmatpush1.msra.mxu0 0.0
    %193 = vmatprep.subr.mxu0 0.0
    %194 = vmatpush1.msra.mxu0 0.0
    %195 = vmatprep.subr.mxu0 0.0
    %196 = vmatpush1.msra.mxu0 0.0
    %197 = vmatprep.subr.mxu0 0.0
    %198 = vmatpush1.msra.mxu0 0.0
    %199 = vmatprep.subr.mxu0 0.0
    %200 = vmatpush1.msra.mxu0 0.0
    %201 = vmatprep.subr.mxu0 0.0
    %202 = vmatpush1.msra.mxu0 0.0
    %203 = vmatprep.subr.mxu0 0.0
    %204 = vmatpush1.msra.mxu0 0.0
    %205 = vmatprep.subr.mxu0 0.0
    %206 = vmatpush1.msra.mxu0 0.0
    %207 = vmatprep.subr.mxu0 0.0
    %208 = vmatpush1.msra.mxu0 0.0
    %209 = vmatprep.subr.mxu0 0.0
    %210 = vmatpush1.msra.mxu0 0.0
    %211 = vmatprep.subr.mxu0 0.0
    %212 = vmatpush1.msra.mxu0 0.0
    %213 = vmatprep.subr.mxu0 0.0
    %214 = vmatpush1.msra.mxu0 0.0
    %215 = vmatprep.subr.mxu0 0.0
    %216 = vmatpush1.msra.mxu0 0.0
    %217 = vmatprep.subr.mxu0 0.0
    %218 = vmatpush1.msra.mxu0 0.0
    %219 = vmatprep.subr.mxu0 0.0
    %220 = vmatpush1.msra.mxu0 0.0
    %221 = vmatprep.subr.mxu0 0.0
    %222 = vmatpush1.msra.mxu0 0.0
    %223 = vmatprep.subr.mxu0 0.0
    %224 = vmatpush1.msra.mxu0 0.0
    %225 = vmatprep.subr.mxu0 0.0
    %226 = vmatpush1.msra.mxu0 0.0
    %227 = vmatprep.subr.mxu0 0.0
    %228 = vmatpush1.msra.mxu0 0.0
    %229 = vmatprep.subr.mxu0 0.0
    %230 = vmatpush1.msra.mxu0 0.0
    %231 = vmatprep.subr.mxu0 0.0
    %232 = vmatpush1.msra.mxu0 0.0
    %233 = vmatprep.subr.mxu0 0.0
    %234 = vmatpush1.msra.mxu0 0.0
    %235 = vmatprep.mubr.f32.mxu0 0.0
    %236 = vmatmul.mubr.f32.gmra.mrb[0].mxu0 %v166
    %v237 = vpop.f32.mrb[0].mxu0
    %v238 = vadd.f32 0.0, %v237
    %v239 = vpop.f32.mrb[0].mxu0
    %240 = vmatprep.mubr.f32.mxu0 0.0
    %241 = vmatmul.mubr.f32.gmra.mrb[0].mxu0 %v169
    %v242 = vpop.f32.mrb[0].mxu0
    %v243 = vadd.f32 0.0, %v242
    %v244 = vpop.f32.mrb[0].mxu0
    %245 = vdwg.mxu0
    %v246 = vld [vmem:[%s5] sm:$0xff]
    %247 = vmatprep.subr.mxu0 0.0
    %248 = vmatpush1.msra.mxu0 %v246
    %249 = vmatprep.subr.mxu0 0.0
    %250 = vmatpush1.msra.mxu0 0.0
    %251 = vmatprep.subr.mxu0 0.0
    %252 = vmatpush1.msra.mxu0 0.0
    %253 = vmatprep.subr.mxu0 0.0
    %254 = vmatpush1.msra.mxu0 0.0
    %255 = vmatprep.subr.mxu0 0.0
    %256 = vmatpush1.msra.mxu0 0.0
    %257 = vmatprep.subr.mxu0 0.0
    %258 = vmatpush1.msra.mxu0 0.0
    %259 = vmatprep.subr.mxu0 0.0
    %260 = vmatpush1.msra.mxu0 0.0
    %261 = vmatprep.subr.mxu0 0.0
    %262 = vmatpush1.msra.mxu0 0.0
    %263 = vmatprep.subr.mxu0 0.0
    %264 = vmatpush1.msra.mxu0 0.0
    %265 = vmatprep.subr.mxu0 0.0
    %266 = vmatpush1.msra.mxu0 0.0
    %267 = vmatprep.subr.mxu0 0.0
    %268 = vmatpush1.msra.mxu0 0.0
    %269 = vmatprep.subr.mxu0 0.0
    %270 = vmatpush1.msra.mxu0 0.0
    %271 = vmatprep.subr.mxu0 0.0
    %272 = vmatpush1.msra.mxu0 0.0
    %273 = vmatprep.subr.mxu0 0.0
    %274 = vmatpush1.msra.mxu0 0.0
    %275 = vmatprep.subr.mxu0 0.0
    %276 = vmatpush1.msra.mxu0 0.0
    %277 = vmatprep.subr.mxu0 0.0
    %278 = vmatpush1.msra.mxu0 0.0
    %279 = vmatprep.subr.mxu0 0.0
    %280 = vmatpush1.msra.mxu0 0.0
    %281 = vmatprep.subr.mxu0 0.0
    %282 = vmatpush1.msra.mxu0 0.0
    %283 = vmatprep.subr.mxu0 0.0
    %284 = vmatpush1.msra.mxu0 0.0
    %285 = vmatprep.subr.mxu0 0.0
    %286 = vmatpush1.msra.mxu0 0.0
    %287 = vmatprep.subr.mxu0 0.0
    %288 = vmatpush1.msra.mxu0 0.0
    %289 = vmatprep.subr.mxu0 0.0
    %290 = vmatpush1.msra.mxu0 0.0
    %291 = vmatprep.subr.mxu0 0.0
    %292 = vmatpush1.msra.mxu0 0.0
    %293 = vmatprep.subr.mxu0 0.0
    %294 = vmatpush1.msra.mxu0 0.0
    %295 = vmatprep.subr.mxu0 0.0
    %296 = vmatpush1.msra.mxu0 0.0
    %297 = vmatprep.subr.mxu0 0.0
    %298 = vmatpush1.msra.mxu0 0.0
    %299 = vmatprep.subr.mxu0 0.0
    %300 = vmatpush1.msra.mxu0 0.0
    %301 = vmatprep.subr.mxu0 0.0
    %302 = vmatpush1.msra.mxu0 0.0
    %303 = vmatprep.subr.mxu0 0.0
    %304 = vmatpush1.msra.mxu0 0.0
    %305 = vmatprep.subr.mxu0 0.0
    %306 = vmatpush1.msra.mxu0 0.0
    %307 = vmatprep.subr.mxu0 0.0
    %308 = vmatpush1.msra.mxu0 0.0
    %309 = vmatprep.subr.mxu0 0.0
    %310 = vmatpush1.msra.mxu0 0.0
    %311 = vmatprep.mubr.f32.mxu0 0.0
    %312 = vmatmul.mubr.f32.gmra.mrb[0].mxu0 %v166
    %v313 = vpop.f32.mrb[0].mxu0
    %v314 = vadd.f32 0.0, %v313
    %v315 = vpop.f32.mrb[0].mxu0
    %316 = vmatprep.mubr.f32.mxu0 0.0
    %317 = vmatmul.mubr.f32.gmra.mrb[0].mxu0 %v169
    %v318 = vpop.f32.mrb[0].mxu0
    %v319 = vadd.f32 0.0, %v318
    %v320 = vpop.f32.mrb[0].mxu0
    %321 = vdwg.mxu0
    %v322 = vld [vmem:[%s6] sm:$0xff]
    %323 = vmatprep.subr.mxu0 0.0
    %324 = vmatpush1.msra.mxu0 %v322
    %325 = vmatprep.subr.mxu0 0.0
    %326 = vmatpush1.msra.mxu0 0.0
    %327 = vmatprep.subr.mxu0 0.0
    %328 = vmatpush1.msra.mxu0 0.0
    %329 = vmatprep.subr.mxu0 0.0
    %330 = vmatpush1.msra.mxu0 0.0
    %331 = vmatprep.subr.mxu0 0.0
    %332 = vmatpush1.msra.mxu0 0.0
    %333 = vmatprep.subr.mxu0 0.0
    %334 = vmatpush1.msra.mxu0 0.0
    %335 = vmatprep.subr.mxu0 0.0
    %336 = vmatpush1.msra.mxu0 0.0
    %337 = vmatprep.subr.mxu0 0.0
    %338 = vmatpush1.msra.mxu0 0.0
    %339 = vmatprep.subr.mxu0 0.0
    %340 = vmatpush1.msra.mxu0 0.0
    %341 = vmatprep.subr.mxu0 0.0
    %342 = vmatpush1.msra.mxu0 0.0
    %343 = vmatprep.subr.mxu0 0.0
    %344 = vmatpush1.msra.mxu0 0.0
    %345 = vmatprep.subr.mxu0 0.0
    %346 = vmatpush1.msra.mxu0 0.0
    %347 = vmatprep.subr.mxu0 0.0
    %348 = vmatpush1.msra.mxu0 0.0
    %349 = vmatprep.subr.mxu0 0.0
    %350 = vmatpush1.msra.mxu0 0.0
    %351 = vmatprep.subr.mxu0 0.0
    %352 = vmatpush1.msra.mxu0 0.0
    %353 = vmatprep.subr.mxu0 0.0
    %354 = vmatpush1.msra.mxu0 0.0
    %355 = vmatprep.subr.mxu0 0.0
    %356 = vmatpush1.msra.mxu0 0.0
    %357 = vmatprep.subr.mxu0 0.0
    %358 = vmatpush1.msra.mxu0 0.0
    %359 = vmatprep.subr.mxu0 0.0
    %360 = vmatpush1.msra.mxu0 0.0
    %361 = vmatprep.subr.mxu0 0.0
    %362 = vmatpush1.msra.mxu0 0.0
    %363 = vmatprep.subr.mxu0 0.0
    %364 = vmatpush1.msra.mxu0 0.0
    %365 = vmatprep.subr.mxu0 0.0
    %366 = vmatpush1.msra.mxu0 0.0
    %367 = vmatprep.subr.mxu0 0.0
    %368 = vmatpush1.msra.mxu0 0.0
    %369 = vmatprep.subr.mxu0 0.0
    %370 = vmatpush1.msra.mxu0 0.0
    %371 = vmatprep.subr.mxu0 0.0
    %372 = vmatpush1.msra.mxu0 0.0
    %373 = vmatprep.subr.mxu0 0.0
    %374 = vmatpush1.msra.mxu0 0.0
    %375 = vmatprep.subr.mxu0 0.0
    %376 = vmatpush1.msra.mxu0 0.0
    %377 = vmatprep.subr.mxu0 0.0
    %378 = vmatpush1.msra.mxu0 0.0
    %379 = vmatprep.subr.mxu0 0.0
    %380 = vmatpush1.msra.mxu0 0.0
    %381 = vmatprep.subr.mxu0 0.0
    %382 = vmatpush1.msra.mxu0 0.0
    %383 = vmatprep.subr.mxu0 0.0
    %384 = vmatpush1.msra.mxu0 0.0
    %385 = vmatprep.subr.mxu0 0.0
    %386 = vmatpush1.msra.mxu0 0.0
    %387 = vmatprep.mubr.f32.mxu0 0.0
    %388 = vmatmul.mubr.f32.gmra.mrb[0].mxu0 %v166
    %v389 = vpop.f32.mrb[0].mxu0
    %v390 = vadd.f32 0.0, %v389
    %v391 = vpop.f32.mrb[0].mxu0
    %392 = vmatprep.mubr.f32.mxu0 0.0
    %393 = vmatmul.mubr.f32.gmra.mrb[0].mxu0 %v169
    %v394 = vpop.f32.mrb[0].mxu0
    %v395 = vadd.f32 0.0, %v394
    %v396 = vpop.f32.mrb[0].mxu0
    %397 = vdwg.mxu0
    %vm398 = vcmask 31744
    %v400 = vsel %vm398, %v238, 0
    %v403 = vsel %vm398, %v314, 0
    %405 = vmatprep.subr.mxu0 0.0
    %406 = vmatpush1.xpose.msra.mxu0 %v403
    %407 = vmatprep.subr.mxu0 0.0
    %408 = vmatpush1.xpose.msra.mxu0 0.0
    %409 = vmatprep.subr.mxu0 0.0
    %410 = vmatpush1.xpose.msra.mxu0 0.0
    %411 = vmatprep.subr.mxu0 0.0
    %412 = vmatpush1.xpose.msra.mxu0 0.0
    %413 = vmatprep.subr.mxu0 0.0
    %414 = vmatpush1.xpose.msra.mxu0 0.0
    %415 = vmatprep.subr.mxu0 0.0
    %416 = vmatpush1.xpose.msra.mxu0 0.0
    %417 = vmatprep.subr.mxu0 0.0
    %418 = vmatpush1.xpose.msra.mxu0 0.0
    %419 = vmatprep.subr.mxu0 0.0
    %420 = vmatpush1.xpose.msra.mxu0 0.0
    %421 = vmatprep.subr.mxu0 0.0
    %422 = vmatpush1.xpose.msra.mxu0 0.0
    %423 = vmatprep.subr.mxu0 0.0
    %424 = vmatpush1.xpose.msra.mxu0 0.0
    %425 = vmatprep.subr.mxu0 0.0
    %426 = vmatpush1.xpose.msra.mxu0 0.0
    %427 = vmatprep.subr.mxu0 0.0
    %428 = vmatpush1.xpose.msra.mxu0 0.0
    %429 = vmatprep.subr.mxu0 0.0
    %430 = vmatpush1.xpose.msra.mxu0 0.0
    %431 = vmatprep.subr.mxu0 0.0
    %432 = vmatpush1.xpose.msra.mxu0 0.0
    %433 = vmatprep.subr.mxu0 0.0
    %434 = vmatpush1.xpose.msra.mxu0 0.0
    %435 = vmatprep.subr.mxu0 0.0
    %436 = vmatpush1.xpose.msra.mxu0 0.0
    %437 = vmatprep.subr.mxu0 0.0
    %438 = vmatpush1.xpose.msra.mxu0 0.0
    %439 = vmatprep.subr.mxu0 0.0
    %440 = vmatpush1.xpose.msra.mxu0 0.0
    %441 = vmatprep.subr.mxu0 0.0
    %442 = vmatpush1.xpose.msra.mxu0 0.0
    %443 = vmatprep.subr.mxu0 0.0
    %444 = vmatpush1.xpose.msra.mxu0 0.0
    %445 = vmatprep.subr.mxu0 0.0
    %446 = vmatpush1.xpose.msra.mxu0 0.0
    %447 = vmatprep.subr.mxu0 0.0
    %448 = vmatpush1.xpose.msra.mxu0 0.0
    %449 = vmatprep.subr.mxu0 0.0
    %450 = vmatpush1.xpose.msra.mxu0 0.0
    %451 = vmatprep.subr.mxu0 0.0
    %452 = vmatpush1.xpose.msra.mxu0 0.0
    %453 = vmatprep.subr.mxu0 0.0
    %454 = vmatpush1.xpose.msra.mxu0 0.0
    %455 = vmatprep.subr.mxu0 0.0
    %456 = vmatpush1.xpose.msra.mxu0 0.0
    %457 = vmatprep.subr.mxu0 0.0
    %458 = vmatpush1.xpose.msra.mxu0 0.0
    %459 = vmatprep.subr.mxu0 0.0
    %460 = vmatpush1.xpose.msra.mxu0 0.0
    %461 = vmatprep.subr.mxu0 0.0
    %462 = vmatpush1.xpose.msra.mxu0 0.0
    %463 = vmatprep.subr.mxu0 0.0
    %464 = vmatpush1.xpose.msra.mxu0 0.0
    %465 = vmatprep.subr.mxu0 0.0
    %466 = vmatpush1.xpose.msra.mxu0 0.0
    %467 = vmatprep.subr.mxu0 0.0
    %468 = vmatpush1.xpose.msra.mxu0 0.0
    %469 = vmatprep.mubr.f32.mxu0 0.0
    %470 = vmatmul.mubr.f32.gmra.mrb[0].mxu0 %v400
    %v471 = vpop.f32.mrb[0].mxu0
    %v472 = vadd.f32 0.0, %v471
    %v473 = vpop.f32.mrb[0].mxu0
    %474 = vdwg.mxu0
    %v476 = vsel %vm398, %v243, 0
    %v479 = vsel %vm398, %v319, 0
    %481 = vmatprep.subr.mxu0 0.0
    %482 = vmatpush1.xpose.msra.mxu0 %v479
    %483 = vmatprep.subr.mxu0 0.0
    %484 = vmatpush1.xpose.msra.mxu0 0.0
    %485 = vmatprep.subr.mxu0 0.0
    %486 = vmatpush1.xpose.msra.mxu0 0.0
    %487 = vmatprep.subr.mxu0 0.0
    %488 = vmatpush1.xpose.msra.mxu0 0.0
    %489 = vmatprep.subr.mxu0 0.0
    %490 = vmatpush1.xpose.msra.mxu0 0.0
    %491 = vmatprep.subr.mxu0 0.0
    %492 = vmatpush1.xpose.msra.mxu0 0.0
    %493 = vmatprep.subr.mxu0 0.0
    %494 = vmatpush1.xpose.msra.mxu0 0.0
    %495 = vmatprep.subr.mxu0 0.0
    %496 = vmatpush1.xpose.msra.mxu0 0.0
    %497 = vmatprep.subr.mxu0 0.0
    %498 = vmatpush1.xpose.msra.mxu0 0.0
    %499 = vmatprep.subr.mxu0 0.0
    %500 = vmatpush1.xpose.msra.mxu0 0.0
    %501 = vmatprep.subr.mxu0 0.0
    %502 = vmatpush1.xpose.msra.mxu0 0.0
    %503 = vmatprep.subr.mxu0 0.0
    %504 = vmatpush1.xpose.msra.mxu0 0.0
    %505 = vmatprep.subr.mxu0 0.0
    %506 = vmatpush1.xpose.msra.mxu0 0.0
    %507 = vmatprep.subr.mxu0 0.0
    %508 = vmatpush1.xpose.msra.mxu0 0.0
    %509 = vmatprep.subr.mxu0 0.0
    %510 = vmatpush1.xpose.msra.mxu0 0.0
    %511 = vmatprep.subr.mxu0 0.0
    %512 = vmatpush1.xpose.msra.mxu0 0.0
    %513 = vmatprep.subr.mxu0 0.0
    %514 = vmatpush1.xpose.msra.mxu0 0.0
    %515 = vmatprep.subr.mxu0 0.0
    %516 = vmatpush1.xpose.msra.mxu0 0.0
    %517 = vmatprep.subr.mxu0 0.0
    %518 = vmatpush1.xpose.msra.mxu0 0.0
    %519 = vmatprep.subr.mxu0 0.0
    %520 = vmatpush1.xpose.msra.mxu0 0.0
    %521 = vmatprep.subr.mxu0 0.0
    %522 = vmatpush1.xpose.msra.mxu0 0.0
    %523 = vmatprep.subr.mxu0 0.0
    %524 = vmatpush1.xpose.msra.mxu0 0.0
    %525 = vmatprep.subr.mxu0 0.0
    %526 = vmatpush1.xpose.msra.mxu0 0.0
    %527 = vmatprep.subr.mxu0 0.0
    %528 = vmatpush1.xpose.msra.mxu0 0.0
    %529 = vmatprep.subr.mxu0 0.0
    %530 = vmatpush1.xpose.msra.mxu0 0.0
    %531 = vmatprep.subr.mxu0 0.0
    %532 = vmatpush1.xpose.msra.mxu0 0.0
    %533 = vmatprep.subr.mxu0 0.0
    %534 = vmatpush1.xpose.msra.mxu0 0.0
    %535 = vmatprep.subr.mxu0 0.0
    %536 = vmatpush1.xpose.msra.mxu0 0.0
    %537 = vmatprep.subr.mxu0 0.0
    %538 = vmatpush1.xpose.msra.mxu0 0.0
    %539 = vmatprep.subr.mxu0 0.0
    %540 = vmatpush1.xpose.msra.mxu0 0.0
    %541 = vmatprep.subr.mxu0 0.0
    %542 = vmatpush1.xpose.msra.mxu0 0.0
    %543 = vmatprep.subr.mxu0 0.0
    %544 = vmatpush1.xpose.msra.mxu0 0.0
    %545 = vmatprep.mubr.f32.mxu0 0.0
    %546 = vmatmul.mubr.f32.gmra.mrb[0].mxu0 %v476
    %v547 = vpop.f32.mrb[0].mxu0
    %v548 = vadd.f32 0.0, %v547
    %v549 = vpop.f32.mrb[0].mxu0
    %550 = vdwg.mxu0
    %v551 = vmul.f32 %v472, 0.5
    %v552 = vmul.f32 %v548, 0.5
    %v553 = vsel %vm164, %v551, -inf
    %554 = vmax.xlane.f32.xlu0 %v553
    %v555 = vpop.xlane.xlu0 %554
    %v556 = vsel %vm164, %v552, -inf
    %557 = vmax.xlane.f32.xlu0 %v556
    %v558 = vpop.xlane.xlu0 %557
    %v559 = vsub.f32 %v551, %v555
    %v560 = vsub.f32 %v552, %v558
    %v561 = vmul.f32 %v559, 1.442695
    %v562 = vpow.pop %v561
    %v563 = vmul.f32 %v560, 1.442695
    %v564 = vpow.pop %v563
    %v565 = vsel %vm164, %v562, 0.0
    %566 = vadd.xlane.f32.xlu0 %v565
    %v567 = vpop.xlane.xlu0 %566
    %v568 = vsel %vm164, %v564, 0.0
    %569 = vadd.xlane.f32.xlu0 %v568
    %v570 = vpop.xlane.xlu0 %569
    %v571 = vrcp.pop %v567
    %v572 = vrcp.pop %v570
    %v573 = vmul.f32 %v562, %v571
    %v574 = vmul.f32 %v564, %v572
    %v576 = vsel %vm164, %v573, 0
    %578 = vmatprep.subr.mxu0 0.0
    %579 = vmatpush1.msra.mxu0 %v390
    %580 = vmatprep.subr.mxu0 0.0
    %581 = vmatpush1.msra.mxu0 0.0
    %582 = vmatprep.subr.mxu0 0.0
    %583 = vmatpush1.msra.mxu0 0.0
    %584 = vmatprep.subr.mxu0 0.0
    %585 = vmatpush1.msra.mxu0 0.0
    %586 = vmatprep.subr.mxu0 0.0
    %587 = vmatpush1.msra.mxu0 0.0
    %588 = vmatprep.subr.mxu0 0.0
    %589 = vmatpush1.msra.mxu0 0.0
    %590 = vmatprep.subr.mxu0 0.0
    %591 = vmatpush1.msra.mxu0 0.0
    %592 = vmatprep.subr.mxu0 0.0
    %593 = vmatpush1.msra.mxu0 0.0
    %594 = vmatprep.subr.mxu0 0.0
    %595 = vmatpush1.msra.mxu0 0.0
    %596 = vmatprep.subr.mxu0 0.0
    %597 = vmatpush1.msra.mxu0 0.0
    %598 = vmatprep.subr.mxu0 0.0
    %599 = vmatpush1.msra.mxu0 0.0
    %600 = vmatprep.subr.mxu0 0.0
    %601 = vmatpush1.msra.mxu0 0.0
    %602 = vmatprep.subr.mxu0 0.0
    %603 = vmatpush1.msra.mxu0 0.0
    %604 = vmatprep.subr.mxu0 0.0
    %605 = vmatpush1.msra.mxu0 0.0
    %606 = vmatprep.subr.mxu0 0.0
    %607 = vmatpush1.msra.mxu0 0.0
    %608 = vmatprep.subr.mxu0 0.0
    %609 = vmatpush1.msra.mxu0 0.0
    %610 = vmatprep.subr.mxu0 0.0
    %611 = vmatpush1.msra.mxu0 0.0
    %612 = vmatprep.subr.mxu0 0.0
    %613 = vmatpush1.msra.mxu0 0.0
    %614 = vmatprep.subr.mxu0 0.0
    %615 = vmatpush1.msra.mxu0 0.0
    %616 = vmatprep.subr.mxu0 0.0
    %617 = vmatpush1.msra.mxu0 0.0
    %618 = vmatprep.subr.mxu0 0.0
    %619 = vmatpush1.msra.mxu0 0.0
    %620 = vmatprep.subr.mxu0 0.0
    %621 = vmatpush1.msra.mxu0 0.0
    %622 = vmatprep.subr.mxu0 0.0
    %623 = vmatpush1.msra.mxu0 0.0
    %624 = vmatprep.subr.mxu0 0.0
    %625 = vmatpush1.msra.mxu0 0.0
    %626 = vmatprep.subr.mxu0 0.0
    %627 = vmatpush1.msra.mxu0 0.0
    %628 = vmatprep.subr.mxu0 0.0
    %629 = vmatpush1.msra.mxu0 0.0
    %630 = vmatprep.subr.mxu0 0.0
    %631 = vmatpush1.msra.mxu0 0.0
    %632 = vmatprep.subr.mxu0 0.0
    %633 = vmatpush1.msra.mxu0 0.0
    %634 = vmatprep.subr.mxu0 0.0
    %635 = vmatpush1.msra.mxu0 0.0
    %636 = vmatprep.subr.mxu0 0.0
    %637 = vmatpush1.msra.mxu0 0.0
    %638 = vmatprep.subr.mxu0 0.0
    %639 = vmatpush1.msra.mxu0 0.0
    %640 = vmatprep.subr.mxu0 0.0
    %641 = vmatpush1.msra.mxu0 0.0
    %642 = vmatprep.mubr.f32.mxu0 0.0
    %643 = vmatmul.mubr.f32.gmra.mrb[0].mxu0 %v576
    %v644 = vpop.f32.mrb[0].mxu0
    %v645 = vadd.f32 0.0, %v644
    %v646 = vpop.f32.mrb[0].mxu0
    %647 = vdwg.mxu0
    %v649 = vsel %vm164, %v574, 0
    %651 = vmatprep.subr.mxu0 0.0
    %652 = vmatpush1.msra.mxu0 %v395
    %653 = vmatprep.subr.mxu0 0.0
    %654 = vmatpush1.msra.mxu0 0.0
    %655 = vmatprep.subr.mxu0 0.0
    %656 = vmatpush1.msra.mxu0 0.0
    %657 = vmatprep.subr.mxu0 0.0
    %658 = vmatpush1.msra.mxu0 0.0
    %659 = vmatprep.subr.mxu0 0.0
    %660 = vmatpush1.msra.mxu0 0.0
    %661 = vmatprep.subr.mxu0 0.0
    %662 = vmatpush1.msra.mxu0 0.0
    %663 = vmatprep.subr.mxu0 0.0
    %664 = vmatpush1.msra.mxu0 0.0
    %665 = vmatprep.subr.mxu0 0.0
    %666 = vmatpush1.msra.mxu0 0.0
    %667 = vmatprep.subr.mxu0 0.0
    %668 = vmatpush1.msra.mxu0 0.0
    %669 = vmatprep.subr.mxu0 0.0
    %670 = vmatpush1.msra.mxu0 0.0
    %671 = vmatprep.subr.mxu0 0.0
    %672 = vmatpush1.msra.mxu0 0.0
    %673 = vmatprep.subr.mxu0 0.0
    %674 = vmatpush1.msra.mxu0 0.0
    %675 = vmatprep.subr.mxu0 0.0
    %676 = vmatpush1.msra.mxu0 0.0
    %677 = vmatprep.subr.mxu0 0.0
    %678 = vmatpush1.msra.mxu0 0.0
    %679 = vmatprep.subr.mxu0 0.0
    %680 = vmatpush1.msra.mxu0 0.0
    %681 = vmatprep.subr.mxu0 0.0
    %682 = vmatpush1.msra.mxu0 0.0
    %683 = vmatprep.subr.mxu0 0.0
    %684 = vmatpush1.msra.mxu0 0.0
    %685 = vmatprep.subr.mxu0 0.0
    %686 = vmatpush1.msra.mxu0 0.0
    %687 = vmatprep.subr.mxu0 0.0
    %688 = vmatpush1.msra.mxu0 0.0
    %689 = vmatprep.subr.mxu0 0.0
    %690 = vmatpush1.msra.mxu0 0.0
    %691 = vmatprep.subr.mxu0 0.0
    %692 = vmatpush1.msra.mxu0 0.0
    %693 = vmatprep.subr.mxu0 0.0
    %694 = vmatpush1.msra.mxu0 0.0
    %695 = vmatprep.subr.mxu0 0.0
    %696 = vmatpush1.msra.mxu0 0.0
    %697 = vmatprep.subr.mxu0 0.0
    %698 = vmatpush1.msra.mxu0 0.0
    %699 = vmatprep.subr.mxu0 0.0
    %700 = vmatpush1.msra.mxu0 0.0
    %701 = vmatprep.subr.mxu0 0.0
    %702 = vmatpush1.msra.mxu0 0.0
    %703 = vmatprep.subr.mxu0 0.0
    %704 = vmatpush1.msra.mxu0 0.0
    %705 = vmatprep.subr.mxu0 0.0
    %706 = vmatpush1.msra.mxu0 0.0
    %707 = vmatprep.subr.mxu0 0.0
    %708 = vmatpush1.msra.mxu0 0.0
    %709 = vmatprep.subr.mxu0 0.0
    %710 = vmatpush1.msra.mxu0 0.0
    %711 = vmatprep.subr.mxu0 0.0
    %712 = vmatpush1.msra.mxu0 0.0
    %713 = vmatprep.subr.mxu0 0.0
    %714 = vmatpush1.msra.mxu0 0.0
    %715 = vmatprep.mubr.f32.mxu0 0.0
    %716 = vmatmul.mubr.f32.gmra.mrb[0].mxu0 %v649
    %v717 = vpop.f32.mrb[0].mxu0
    %v718 = vadd.f32 0.0, %v717
    %v719 = vpop.f32.mrb[0].mxu0
    %720 = vdwg.mxu0
    %v721 = vld [vmem:[%s7] sm:$0xf]
    %v723 = vsel %vm398, %v645, 0
    %v726 = vsel %vm398, %v718, 0
    %vm728 = vcmask 1043456
    %v730 = vsel %vm728, %v721, 0
    %732 = vmatprep.subr.mxu0 0.0
    %733 = vmatpush1.msra.mxu0 %v730
    %734 = vmatprep.subr.mxu0 0.0
    %735 = vmatpush1.msra.mxu0 0.0
    %736 = vmatprep.subr.mxu0 0.0
    %737 = vmatpush1.msra.mxu0 0.0
    %738 = vmatprep.subr.mxu0 0.0
    %739 = vmatpush1.msra.mxu0 0.0
    %740 = vmatprep.subr.mxu0 0.0
    %741 = vmatpush1.msra.mxu0 0.0
    %742 = vmatprep.subr.mxu0 0.0
    %743 = vmatpush1.msra.mxu0 0.0
    %744 = vmatprep.subr.mxu0 0.0
    %745 = vmatpush1.msra.mxu0 0.0
    %746 = vmatprep.subr.mxu0 0.0
    %747 = vmatpush1.msra.mxu0 0.0
    %748 = vmatprep.subr.mxu0 0.0
    %749 = vmatpush1.msra.mxu0 0.0
    %750 = vmatprep.subr.mxu0 0.0
    %751 = vmatpush1.msra.mxu0 0.0
    %752 = vmatprep.subr.mxu0 0.0
    %753 = vmatpush1.msra.mxu0 0.0
    %754 = vmatprep.subr.mxu0 0.0
    %755 = vmatpush1.msra.mxu0 0.0
    %756 = vmatprep.subr.mxu0 0.0
    %757 = vmatpush1.msra.mxu0 0.0
    %758 = vmatprep.subr.mxu0 0.0
    %759 = vmatpush1.msra.mxu0 0.0
    %760 = vmatprep.subr.mxu0 0.0
    %761 = vmatpush1.msra.mxu0 0.0
    %762 = vmatprep.subr.mxu0 0.0
    %763 = vmatpush1.msra.mxu0 0.0
    %764 = vmatprep.subr.mxu0 0.0
    %765 = vmatpush1.msra.mxu0 0.0
    %766 = vmatprep.subr.mxu0 0.0
    %767 = vmatpush1.msra.mxu0 0.0
    %768 = vmatprep.subr.mxu0 0.0
    %769 = vmatpush1.msra.mxu0 0.0
    %770 = vmatprep.subr.mxu0 0.0
    %771 = vmatpush1.msra.mxu0 0.0
    %772 = vmatprep.subr.mxu0 0.0
    %773 = vmatpush1.msra.mxu0 0.0
    %774 = vmatprep.subr.mxu0 0.0
    %775 = vmatpush1.msra.mxu0 0.0
    %776 = vmatprep.subr.mxu0 0.0
    %777 = vmatpush1.msra.mxu0 0.0
    %778 = vmatprep.subr.mxu0 0.0
    %779 = vmatpush1.msra.mxu0 0.0
    %780 = vmatprep.subr.mxu0 0.0
    %781 = vmatpush1.msra.mxu0 0.0
    %782 = vmatprep.subr.mxu0 0.0
    %783 = vmatpush1.msra.mxu0 0.0
    %784 = vmatprep.subr.mxu0 0.0
    %785 = vmatpush1.msra.mxu0 0.0
    %786 = vmatprep.subr.mxu0 0.0
    %787 = vmatpush1.msra.mxu0 0.0
    %788 = vmatprep.subr.mxu0 0.0
    %789 = vmatpush1.msra.mxu0 0.0
    %790 = vmatprep.subr.mxu0 0.0
    %791 = vmatpush1.msra.mxu0 0.0
    %792 = vmatprep.subr.mxu0 0.0
    %793 = vmatpush1.msra.mxu0 0.0
    %794 = vmatprep.subr.mxu0 0.0
    %795 = vmatpush1.msra.mxu0 0.0
    %796 = vmatprep.mubr.f32.mxu0 0.0
    %797 = vmatmul.mubr.f32.gmra.mrb[0].mxu0 %v723
    %v798 = vpop.f32.mrb[0].mxu0
    %v799 = vadd.f32 0.0, %v798
    %v800 = vpop.f32.mrb[0].mxu0
    %801 = vmatprep.mubr.f32.mxu0 0.0
    %802 = vmatmul.mubr.f32.gmra.mrb[0].mxu0 %v726
    %v803 = vpop.f32.mrb[0].mxu0
    %v804 = vadd.f32 0.0, %v803
    %v805 = vpop.f32.mrb[0].mxu0
    %806 = vdwg.mxu0
    %v807 = vadd.f32 %v100, %v799
    %v808 = vadd.f32 %v103, %v804
    %809 = vst.msk [vmem:[#allocation2] sm:$0xff] %vm61, %v807
    %810 = vst.msk [vmem:[#allocation2 + $0x8] sm:$0xff] %vm61, %v808
    // Predicated region
    $region34: #{tpu_custom_call.1} parent=1 // pred_check
      _
    $region35: #{tpu_custom_call.1} parent=1 // pred_check_branch
      %812 = sbr.rel (0) target = $region37
    $region36: #{tpu_custom_call.1} parent=1 // pred_region
      %s814 = ssub.s32 256, 256
      %815 = vsyncadd [#allocation3], %s814
      %s816 = sshll.u32 [#allocation2], 4
      %s817 = int_to_ptr.vmem [resolvable:$true] %s816
      %822 = dma.vmem_to_hbm [thread:$0]  %s817, 256, %s8, [#allocation3], 128, 128, 8
    $region37: #{tpu_custom_call.1} parent=1 // pred_fallthru
      _
    // Predicated region
    $region38: #{tpu_custom_call.1} parent=1 // pred_check
      _
    $region39: #{tpu_custom_call.1} parent=1 // pred_check_branch
      %824 = sbr.rel (0) target = $region41
    $region40: #{tpu_custom_call.1} parent=1 // pred_region
      %825 = dma.done [#allocation3], 256
    $region41: #{tpu_custom_call.1} parent=1 // pred_fallthru
      _
    %826 = vsyncpa [#allocation3], 1

</llo_original>
